<compile_context>
chip_gen: v6e
topology: v6e:2x2x1
jax: 0.10.0
libtpu: 0.0.40
codegen_flags: <defaults>
</compile_context>

<pallas_src>
import functools
import math

import jax
import jax.numpy as jnp
from jax.experimental import pallas as pl
from jax.experimental.pallas import tpu as pltpu

LANES = 128


def rope_kernel(x_ref, cos_ref, se_ref, so_ref, o_ref):
    """out = x*cos + rotate_half(x)*sin with sign/parity folded into se/so.

    x_ref / o_ref blocks: (1, TR, 128); table blocks: (TR, 128), constant
    across the grid (fetched once).  Compute dtype == table dtype.
    """
    x = x_ref[0].astype(cos_ref.dtype)                # (TR, 128)
    lanes = x.shape[-1]
    # pltpu.roll follows jnp.roll semantics: roll(x, s)[l] = x[(l - s) % lanes].
    x_next = pltpu.roll(x, lanes - 1, 1)              # x[l+1]; wrap lane masked by se
    x_prev = pltpu.roll(x, 1, 1)                      # x[l-1]; wrap lane masked by so
    out = x * cos_ref[...] + x_next * se_ref[...] + x_prev * so_ref[...]
    o_ref[0] = out.astype(o_ref.dtype)


def make_rope_table_block(d_model, tile_rows, max_len=5000, dtype=jnp.float32):
    """One (tile_rows, 128) block of each of cos / (-sin on even lanes) /
    (+sin on odd lanes).

    The module's tables depend on the position only through (pos mod 7), so
    the flattened (seq*d_model) tables are periodic with period 7*d_model
    elements.  As long as every row tile starts at a multiple of
    P = lcm(7*d_model, 128)/128 packed rows, this single block with a constant
    index_map serves the whole grid.
    """
    assert d_model % 2 == 0, "d_model must be even for ROPE."
    inv_freq = 1.0 / (50000.0 ** (jnp.arange(0, d_model, 2, dtype=jnp.float32) / d_model))
    positions = jnp.arange(0, max_len, dtype=jnp.float32)
    sinusoid = positions[:7, None] * inv_freq[None, :]           # only first 7 used
    sin7 = jnp.repeat(jnp.sin(sinusoid), 2, axis=-1)             # (7, D) repeat_interleave(2)
    cos7 = jnp.repeat(jnp.cos(sinusoid), 2, axis=-1)             # (7, D)
    even = (jnp.arange(d_model) % 2) == 0
    se7 = jnp.where(even[None, :], -sin7, 0.0)                   # multiplies x[l+1]
    so7 = jnp.where(even[None, :], 0.0, sin7)                    # multiplies x[l-1]

    period = 7 * d_model
    n = tile_rows * LANES
    reps = -(-n // period)                                       # ceil

    def periodic_block(t7):
        flat = jnp.tile(t7.reshape(period), reps)[:n]
        return flat.reshape(tile_rows, LANES).astype(dtype)

    return periodic_block(cos7), periodic_block(se7), periodic_block(so7)


def _row_tile_step(d_model):
    """Row tiles must start at table phase 0 and stay on native sublane tiling:
    multiple of P = lcm(7*d_model, 128)/128 (packed-row table period) and of 16
    sublanes (native (16,128) tiling for 16-bit activations, superset of the
    (8,128) f32 requirement)."""
    p = (7 * d_model) // math.gcd(7 * d_model, LANES)
    return (p * 16) // math.gcd(p, 16)


def _pick_row_tile(rows, batch, step, max_rows=2016):
    """Largest row tile that (a) keeps double-buffered x/out + the 3 constant
    table blocks around 10 MiB at f32 (inside every generation's scoped VMEM),
    (b) is a multiple of `step` whenever the row axis is actually split, so the
    constant-index-map table block is phase-correct for every tile, and
    (c) leaves >= 2 'parallel' grid steps when possible so both of v7x's
    TensorCores get work (v5e/v6e are single-TC; no effect there)."""
    if rows <= max_rows:
        tr = rows                                    # single full-extent block
    elif step <= max_rows:
        tr = (max_rows // step) * step               # phase-aligned; ragged tail is OK
    else:
        # Pathological table period (> max_rows packed rows): keep one giant
        # tile rather than breaking the table phase alignment.
        tr = rows
    if batch * pl.cdiv(rows, tr) < 2 and rows >= 2 * step:
        tr = max(step, (tr // 2 // step) * step)
    return tr


def _pack_rows(flat_arr, rows):
    """Zero-pad a (..., n) array to rows*128 and reshape to (..., rows, 128).
    Zero-copy (pure reshape) when n % 128 == 0; otherwise pays one extra HBM
    pass -- arrange S*D % 128 == 0 upstream to avoid it."""
    n = flat_arr.shape[-1]
    pad = rows * LANES - n
    if pad:
        flat_arr = jnp.pad(flat_arr, [(0, 0)] * (flat_arr.ndim - 1) + [(0, pad)])
    return flat_arr.reshape(flat_arr.shape[:-1] + (rows, LANES))


@functools.partial(jax.jit, static_argnames=("max_len", "compute_dtype"))
def rotary_channel_embedding_fixed(x, max_len=5000, compute_dtype=jnp.float32):
    """Forward pass of RotaryChannelEmbeddingFixed for x of shape (B, S, D).

    compute_dtype: in-kernel math/table dtype.  Default f32 is safe on every
    TPU generation.  On v6e/v7x with bf16 activations, compute_dtype=bfloat16
    removes the per-element casts and halves vreg traffic (do NOT use on v5e,
    which has no bf16 VPU).
    """
    b, s, d = x.shape
    assert d % 2 == 0, "d_model must be even for ROPE."
    assert s % 7 == 0, "forward tiles the first 7 positions; seq_len % 7 must be 0"

    flat = s * d
    rows = pl.cdiv(flat, LANES)
    step = _row_tile_step(d)
    tr = _pick_row_tile(rows, b, step)
    r_tiles = pl.cdiv(rows, tr)

    # Constant (TR,128) periodic table blocks -- fetched once for the whole grid.
    cos_t, se_t, so_t = make_rope_table_block(d, tr, max_len, dtype=compute_dtype)

    # Lane-dense repack: (B, S, D) -> (B, rows, 128).
    xp = _pack_rows(x.reshape(b, flat), rows)

    out_p = pl.pallas_call(
        rope_kernel,
        out_shape=jax.ShapeDtypeStruct((b, rows, LANES), x.dtype),
        grid=(r_tiles, b),
        in_specs=[
            pl.BlockSpec((1, tr, LANES), lambda r, i: (i, r, 0)),   # x (streamed)
            pl.BlockSpec((tr, LANES), lambda r, i: (0, 0)),         # cos   (resident)
            pl.BlockSpec((tr, LANES), lambda r, i: (0, 0)),         # -sin on even lanes
            pl.BlockSpec((tr, LANES), lambda r, i: (0, 0)),         # +sin on odd lanes
        ],
        out_specs=pl.BlockSpec((1, tr, LANES), lambda r, i: (i, r, 0)),
        compiler_params=pltpu.CompilerParams(
            dimension_semantics=("parallel", "parallel"),
            vmem_limit_bytes=32 * 1024 * 1024),
    )(xp, cos_t, se_t, so_t)

    out = out_p.reshape(b, rows * LANES)
    if rows * LANES != flat:
        out = out[:, :flat]          # drop the zero pad (extra HBM pass; see _pack_rows)
    return out.reshape(b, s, d)


def ref_forward(x, max_len=5000):
    """Pure-JAX transcription of the PyTorch forward (for verification)."""
    b, s, d = x.shape
    xf = x.astype(jnp.float32)
    inv_freq = 1.0 / (50000.0 ** (jnp.arange(0, d, 2, dtype=jnp.float32) / d))
    positions = jnp.arange(0, max_len, dtype=jnp.float32)
    sinusoid = positions[:, None] * inv_freq[None, :]
    sin_full = jnp.tile(jnp.repeat(jnp.sin(sinusoid)[:7], 2, axis=-1), (s // 7, 1))
    cos_full = jnp.tile(jnp.repeat(jnp.cos(sinusoid)[:7], 2, axis=-1), (s // 7, 1))
    x_even = -xf[..., 1::2]
    x_odd = xf[..., 0::2]
    rot = jnp.stack([x_even, x_odd], axis=-1).reshape(b, s, d)
    return xf * cos_full[None] + rot * sin_full[None]


if __name__ == "__main__":
    key = jax.random.PRNGKey(0)
    k1, k2, k3, k4 = jax.random.split(key, 4)

    def check(x, tol, name):
        out = jax.block_until_ready(rotary_channel_embedding_fixed(x))
        ref = jax.block_until_ready(ref_forward(x))
        assert out.shape == x.shape, name
        assert jnp.allclose(out.astype(jnp.float32), ref, atol=tol, rtol=tol), \
            f"mismatch vs reference ({name})"

    # 1) Lane-dense aligned case (S*D % 128 == 0), single row tile, grid (1, B).
    check(jax.random.normal(k1, (2, 56, 32), dtype=jnp.float32), 1e-5, "aligned f32")

    # 2) Padded repack fallback (S*D % 128 != 0) with the periodic tables.
    check(jax.random.normal(k2, (2, 14, 32), dtype=jnp.float32), 1e-5, "padded f32")

    # 3) Multi-tile path: constant-index-map periodic tables across several row
    #    tiles, a ragged last tile, and the v7x two-TensorCore balance split
    #    (batch=1 -> row tile is halved to a phase-aligned 112 rows).
    check(jax.random.normal(k3, (1, 1120, 32), dtype=jnp.float32), 1e-5, "multi-tile f32")

    # 4) bf16 activations: x/out stream in bf16 (half the HBM traffic); math
    #    stays f32 in-kernel (safe default on every generation).
    check(jax.random.normal(k4, (2, 56, 32)).astype(jnp.bfloat16), 5e-2, "bf16 io")

    print("KERNEL_OK")
</pallas_src>

<mosaic_0001>
module attributes {stable_mosaic.version = 11 : i64} {
  func.func @rope_kernel(%arg0: i32, %arg1: i32, %arg2: memref<1x14x128xf32, #tpu.memory_space<vmem>>, %arg3: memref<14x128xf32, #tpu.memory_space<vmem>>, %arg4: memref<14x128xf32, #tpu.memory_space<vmem>>, %arg5: memref<14x128xf32, #tpu.memory_space<vmem>>, %arg6: memref<1x14x128xf32, #tpu.memory_space<vmem>>) attributes {dimension_semantics = [#tpu.dimension_semantics<parallel>, #tpu.dimension_semantics<parallel>], iteration_bounds = array<i64: 1, 2>, scalar_prefetch = 0 : i64, scratch_operands = 0 : i64, tpu.core_type = #tpu.core_type<tc>, window_params = [{transform_indices = @transform_0, window_bounds = array<i64: 1, 14, 128>}, {pipeline_mode = #tpu.pipeline_mode<synchronous>, transform_indices = @transform_1, window_bounds = array<i64: 14, 128>}, {pipeline_mode = #tpu.pipeline_mode<synchronous>, transform_indices = @transform_2, window_bounds = array<i64: 14, 128>}, {pipeline_mode = #tpu.pipeline_mode<synchronous>, transform_indices = @transform_3, window_bounds = array<i64: 14, 128>}, {transform_indices = @transform_4, window_bounds = array<i64: 1, 14, 128>}]} {
    %c0 = arith.constant 0 : index
    %c0_0 = arith.constant 0 : index
    %c0_1 = arith.constant 0 : index
    %0 = vector.load %arg2[%c0, %c0_0, %c0_1] : memref<1x14x128xf32, #tpu.memory_space<vmem>>, vector<1x14x128xf32>
    %1 = vector.shape_cast %0 : vector<1x14x128xf32> to vector<14x128xf32>
    %c127_i32 = arith.constant 127 : i32
    %2 = tpu.dynamic_rotate %1 by %c127_i32 dim 1 : vector<14x128xf32>, i32 -> vector<14x128xf32>
    %c1_i32 = arith.constant 1 : i32
    %3 = tpu.dynamic_rotate %1 by %c1_i32 dim 1 : vector<14x128xf32>, i32 -> vector<14x128xf32>
    %c0_2 = arith.constant 0 : index
    %c0_3 = arith.constant 0 : index
    %4 = vector.load %arg3[%c0_2, %c0_3] : memref<14x128xf32, #tpu.memory_space<vmem>>, vector<14x128xf32>
    %5 = arith.mulf %1, %4 : vector<14x128xf32>
    %c0_4 = arith.constant 0 : index
    %c0_5 = arith.constant 0 : index
    %6 = vector.load %arg4[%c0_4, %c0_5] : memref<14x128xf32, #tpu.memory_space<vmem>>, vector<14x128xf32>
    %7 = arith.mulf %2, %6 : vector<14x128xf32>
    %8 = arith.addf %5, %7 : vector<14x128xf32>
    %c0_6 = arith.constant 0 : index
    %c0_7 = arith.constant 0 : index
    %9 = vector.load %arg5[%c0_6, %c0_7] : memref<14x128xf32, #tpu.memory_space<vmem>>, vector<14x128xf32>
    %10 = arith.mulf %3, %9 : vector<14x128xf32>
    %11 = arith.addf %8, %10 : vector<14x128xf32>
    %c0_8 = arith.constant 0 : index
    %c0_9 = arith.constant 0 : index
    %c0_10 = arith.constant 0 : index
    %12 = vector.load %arg6[%c0_8, %c0_9, %c0_10] : memref<1x14x128xf32, #tpu.memory_space<vmem>>, vector<1x14x128xf32>
    %13 = vector.shape_cast %12 : vector<1x14x128xf32> to vector<14x128xf32>
    %14 = vector.shape_cast %11 : vector<14x128xf32> to vector<1x14x128xf32>
    tpu.vector_store %arg6[%c0_8, %c0_9, %c0_10], %14 {strides = array<i32>} : memref<1x14x128xf32, #tpu.memory_space<vmem>>, vector<1x14x128xf32>,
    return
  }
  func.func @transform_0(%arg0: i32, %arg1: i32) -> (i32, i32, i32) {
    %c0_i32 = arith.constant 0 : i32
    %c0_i32_0 = arith.constant 0 : i32
    return %arg1, %arg0, %c0_i32 : i32, i32, i32
  }
  func.func @transform_1(%arg0: i32, %arg1: i32) -> (i32, i32) {
    %c0_i32 = arith.constant 0 : i32
    %c0_i32_0 = arith.constant 0 : i32
    %c0_i32_1 = arith.constant 0 : i32
    return %c0_i32, %c0_i32_0 : i32, i32
  }
  func.func @transform_2(%arg0: i32, %arg1: i32) -> (i32, i32) {
    %c0_i32 = arith.constant 0 : i32
    %c0_i32_0 = arith.constant 0 : i32
    %c0_i32_1 = arith.constant 0 : i32
    return %c0_i32, %c0_i32_0 : i32, i32
  }
  func.func @transform_3(%arg0: i32, %arg1: i32) -> (i32, i32) {
    %c0_i32 = arith.constant 0 : i32
    %c0_i32_0 = arith.constant 0 : i32
    %c0_i32_1 = arith.constant 0 : i32
    return %c0_i32, %c0_i32_0 : i32, i32
  }
  func.func @transform_4(%arg0: i32, %arg1: i32) -> (i32, i32, i32) {
    %c0_i32 = arith.constant 0 : i32
    %c0_i32_0 = arith.constant 0 : i32
    return %arg1, %arg0, %c0_i32 : i32, i32, i32
  }
}

</mosaic_0001>

<llo_original>
// kernel: tile.14
$region0: #{tile.14}
  #allocation0 [shape = 's32[1]{0}', space=sflag, size = 0x4, scoped, tag = 'scoped memory for tile.14']
  %s0 = inlined_call_operand.vmem [shape: f32[224], index: 0, kind: input, shape index: {}]
  %s1 = inlined_call_operand.vmem [shape: f32[8,224], index: 1, kind: output, shape index: {}]
  // Predicated region
  $region2: #{tile.14} parent=0 // pred_check
    _
  $region3: #{tile.14} parent=0 // pred_check_branch
    %3 = sbr.rel (0) target = $region5
  $region4: #{tile.14} parent=0 // pred_region
    _
  $region5: #{tile.14} parent=0 // pred_fallthru
    _
  %v4 = vld [vmem:[%s0] ss:$0 sm:$0xff]
  %5 = vst [vmem:[%s1] sm:$0xff] %v4
  %s6 = scalar_lea.vmem %s0, 1
  %v7 = vld [vmem:[%s6] ss:$0 sm:$0xff]
  %s8 = scalar_lea.vmem %s1, 8
  %9 = vst [vmem:[%s8] sm:$0xff] %v7

// kernel: tile.15
$region0: #{tile.15}
  %s0 = inlined_call_operand.vmem [shape: f32[8,224], index: 0, kind: input, shape index: {}]
  %s1 = inlined_call_operand.vmem [shape: f32[14,128], index: 1, kind: output, shape index: {}]
  %s2 = scalar_lea.vmem %s0, 8
  %s3 = smov 3
  %v4 = vld [vmem:[%s2] ss:$4 sm:%s3]
  %vm5 = vcmask 785408
  %s6 = scalar_lea.vmem %s1, 1
  %7 = vst.msk [vmem:[%s6] ss:$7 sm:$0x3] %vm5, %v4
  %s8 = smov 3
  %v9 = vld [vmem:[%s0] ss:$4 sm:%s8]
  %10 = vst [vmem:[%s1] ss:$7 sm:$0x3] %v9
  %s11 = scalar_lea.vmem %s0, 9
  %s12 = smov 3
  %v13 = vld [vmem:[%s11] ss:$4 sm:%s12]
  %s14 = scalar_lea.vmem %s0, 1
  %v15 = vld.sshfl [vmem:[%s14] sm:$0xff pattern:$0xccccc480]
  %vm16 = vcmask 261120
  %v17 = vsel %vm16, %v15, %v13
  %18 = vrot.lane.b32.xlu0 %v17, 96
  %v19 = vpop.permute.xlu0 %18
  %vm20 = vcmask 523264
  %s21 = scalar_lea.vmem %s1, 3
  %22 = vst.msk [vmem:[%s21] ss:$7 sm:$0x3] %vm20, %v19
  %vm23 = vcmask 1048320
  %s24 = scalar_lea.vmem %s1, 1
  %25 = vst.msk [vmem:[%s24] sm:$0x3] %vm23, %v19
  %s26 = scalar_lea.vmem %s1, 6
  %27 = vst.msk [vmem:[%s26] sm:$0xc] %vm23, %v19
  %s28 = scalar_lea.vmem %s0, 1
  %s29 = smov 3
  %v30 = vld [vmem:[%s28] ss:$4 sm:%s29]
  %31 = vrot.lane.b32.xlu0 %v30, 96
  %v32 = vpop.permute.xlu0 %31
  %vm33 = vcmask 785408
  %s34 = scalar_lea.vmem %s1, 2
  %35 = vst.msk [vmem:[%s34] ss:$7 sm:$0x3] %vm33, %v32
  %s36 = scalar_lea.vmem %s0, 10
  %s37 = smov 3
  %v38 = vld [vmem:[%s36] ss:$4 sm:%s37]
  %s39 = scalar_lea.vmem %s0, 2
  %v40 = vld.sshfl [vmem:[%s39] sm:$0xff pattern:$0xccccc480]
  %vm41 = vcmask 523264
  %v42 = vsel %vm41, %v40, %v38
  %43 = vrot.lane.b32.xlu0 %v42, 64
  %v44 = vpop.permute.xlu0 %43
  %vm45 = vcmask 261120
  %s46 = scalar_lea.vmem %s1, 5
  %47 = vst.msk [vmem:[%s46] ss:$7 sm:$0x3] %vm45, %v44
  %vm48 = vcmask 1048064
  %s49 = scalar_lea.vmem %s1, 3
  %50 = vst.msk [vmem:[%s49] sm:$0x3] %vm48, %v44
  %s51 = scalar_lea.vmem %s1, 8
  %52 = vst.msk [vmem:[%s51] sm:$0xc] %vm48, %v44
  %s53 = scalar_lea.vmem %s0, 2
  %s54 = smov 3
  %v55 = vld [vmem:[%s53] ss:$4 sm:%s54]
  %56 = vrot.lane.b32.xlu0 %v55, 64
  %v57 = vpop.permute.xlu0 %56
  %vm58 = vcmask 523264
  %s59 = scalar_lea.vmem %s1, 4
  %60 = vst.msk [vmem:[%s59] ss:$7 sm:$0x3] %vm58, %v57
  %s61 = scalar_lea.vmem %s0, 3
  %s62 = smov 3
  %v63 = vld [vmem:[%s61] ss:$4 sm:%s62]
  %s64 = scalar_lea.vmem %s0, 3
  %v65 = vld.sshfl [vmem:[%s64] sm:$0xff pattern:$0xccccc480]
  %vm66 = vcmask 785408
  %v67 = vsel %vm66, %v65, %v63
  %68 = vrot.lane.b32.xlu0 %v67, 32
  %v69 = vpop.permute.xlu0 %68
  %vm70 = vcmask 261120
  %s71 = scalar_lea.vmem %s1, 6
  %72 = vst.msk [vmem:[%s71] ss:$7 sm:$0x3] %vm70, %v69
  %vm73 = vcmask 1047808
  %s74 = scalar_lea.vmem %s1, 5
  %75 = vst.msk [vmem:[%s74] sm:$0x3] %vm73, %v69
  %s76 = scalar_lea.vmem %s1, 10
  %77 = vst.msk [vmem:[%s76] sm:$0xc] %vm73, %v69

// kernel: tile.13
$region0: #{tile.13}
  %s0 = inlined_call_operand.vmem [shape: f32[7,16,2], index: 0, kind: input, shape index: {}]
  %s1 = inlined_call_operand.vmem [shape: f32[224], index: 1, kind: output, shape index: {}]
  $region1: #{tile.13} parent=0
    #allocation0 [shape = 'u8[4096]{0}', space=vmem, size = 0x1000, scoped, tag = 'scoped mem for output reshape']
    %v2 = vld [vmem:[%s0] sm:$0x1]
    %s3 = scalar_lea.vmem %s0, 63
    %v4 = vld [vmem:[%s3] sm:$0x2]
    %vm5 = vcmask 1041409
    %v6 = vsel %vm5, %v4, %v2
    %vm7 = vcmask 15360
    %8 = vst.msk [vmem:[#allocation0] sm:$0x3] %vm7, %v6
    %s9 = scalar_lea.vmem %s0, 63
    %v10 = vld [vmem:[%s9] sm:$0x1]
    %11 = vrot.lane.b32.xlu0 %v10, 126
    %v12 = vpop.permute.xlu0 %11
    %vm13 = vcmask 1048560
    %14 = vst.msk [vmem:[#allocation0] sm:$0x1] %vm13, %v12
    %s15 = scalar_lea.vmem %s0, 62
    %v16 = vld [vmem:[%s15] sm:$0x1]
    %17 = vrot.lane.b32.xlu0 %v16, 124
    %v18 = vpop.permute.xlu0 %17
    %vm19 = vcmask 1032160
    %20 = vst.msk [vmem:[#allocation0] sm:$0x1] %vm19, %v18
    %s21 = scalar_lea.vmem %s0, 61
    %v22 = vld [vmem:[%s21] sm:$0x1]
    %23 = vrot.lane.b32.xlu0 %v22, 122
    %v24 = vpop.permute.xlu0 %23
    %vm25 = vcmask 1015760
    %26 = vst.msk [vmem:[#allocation0] sm:$0x1] %vm25, %v24
    %s27 = scalar_lea.vmem %s0, 60
    %v28 = vld [vmem:[%s27] sm:$0x1]
    %29 = vrot.lane.b32.xlu0 %v28, 120
    %v30 = vpop.permute.xlu0 %29
    %vm31 = vcmask 999360
    %32 = vst.msk [vmem:[#allocation0] sm:$0x1] %vm31, %v30
    %s33 = scalar_lea.vmem %s0, 59
    %v34 = vld [vmem:[%s33] sm:$0x1]
    %35 = vrot.lane.b32.xlu0 %v34, 118
    %v36 = vpop.permute.xlu0 %35
    %vm37 = vcmask 982960
    %38 = vst.msk [vmem:[#allocation0] sm:$0x1] %vm37, %v36
    %s39 = scalar_lea.vmem %s0, 58
    %v40 = vld [vmem:[%s39] sm:$0x1]
    %41 = vrot.lane.b32.xlu0 %v40, 116
    %v42 = vpop.permute.xlu0 %41
    %vm43 = vcmask 966560
    %44 = vst.msk [vmem:[#allocation0] sm:$0x1] %vm43, %v42
    %s45 = scalar_lea.vmem %s0, 57
    %v46 = vld [vmem:[%s45] sm:$0x1]
    %47 = vrot.lane.b32.xlu0 %v46, 114
    %v48 = vpop.permute.xlu0 %47
    %vm49 = vcmask 950160
    %50 = vst.msk [vmem:[#allocation0] sm:$0x1] %vm49, %v48
    %s51 = scalar_lea.vmem %s0, 56
    %v52 = vld [vmem:[%s51] sm:$0x1]
    %53 = vrot.lane.b32.xlu0 %v52, 112
    %v54 = vpop.permute.xlu0 %53
    %vm55 = vcmask 933760
    %56 = vst.msk [vmem:[#allocation0] sm:$0x1] %vm55, %v54
    %s57 = scalar_lea.vmem %s0, 55
    %v58 = vld [vmem:[%s57] sm:$0x1]
    %59 = vrot.lane.b32.xlu0 %v58, 110
    %v60 = vpop.permute.xlu0 %59
    %vm61 = vcmask 917360
    %62 = vst.msk [vmem:[#allocation0] sm:$0x1] %vm61, %v60
    %s63 = scalar_lea.vmem %s0, 54
    %v64 = vld [vmem:[%s63] sm:$0x1]
    %65 = vrot.lane.b32.xlu0 %v64, 108
    %v66 = vpop.permute.xlu0 %65
    %vm67 = vcmask 900960
    %68 = vst.msk [vmem:[#allocation0] sm:$0x1] %vm67, %v66
    %s69 = scalar_lea.vmem %s0, 53
    %v70 = vld [vmem:[%s69] sm:$0x1]
    %71 = vrot.lane.b32.xlu0 %v70, 106
    %v72 = vpop.permute.xlu0 %71
    %vm73 = vcmask 884560
    %74 = vst.msk [vmem:[#allocation0] sm:$0x1] %vm73, %v72
    %s75 = scalar_lea.vmem %s0, 52
    %v76 = vld [vmem:[%s75] sm:$0x1]
    %77 = vrot.lane.b32.xlu0 %v76, 104
    %v78 = vpop.permute.xlu0 %77
    %vm79 = vcmask 868160
    %80 = vst.msk [vmem:[#allocation0] sm:$0x1] %vm79, %v78
    %s81 = scalar_lea.vmem %s0, 51
    %v82 = vld [vmem:[%s81] sm:$0x1]
    %83 = vrot.lane.b32.xlu0 %v82, 102
    %v84 = vpop.permute.xlu0 %83
    %vm85 = vcmask 851760
    %86 = vst.msk [vmem:[#allocation0] sm:$0x1] %vm85, %v84
    %s87 = scalar_lea.vmem %s0, 50
    %v88 = vld [vmem:[%s87] sm:$0x1]
    %89 = vrot.lane.b32.xlu0 %v88, 100
    %v90 = vpop.permute.xlu0 %89
    %vm91 = vcmask 835360
    %92 = vst.msk [vmem:[#allocation0] sm:$0x1] %vm91, %v90
    %s93 = scalar_lea.vmem %s0, 49
    %v94 = vld [vmem:[%s93] sm:$0x1]
    %95 = vrot.lane.b32.xlu0 %v94, 98
    %v96 = vpop.permute.xlu0 %95
    %vm97 = vcmask 818960
    %98 = vst.msk [vmem:[#allocation0] sm:$0x1] %vm97, %v96
    %s99 = scalar_lea.vmem %s0, 48
    %v100 = vld [vmem:[%s99] sm:$0x1]
    %101 = vrot.lane.b32.xlu0 %v100, 96
    %v102 = vpop.permute.xlu0 %101
    %vm103 = vcmask 802560
    %104 = vst.msk [vmem:[#allocation0] sm:$0x1] %vm103, %v102
    %s105 = scalar_lea.vmem %s0, 47
    %v106 = vld [vmem:[%s105] sm:$0x1]
    %s107 = scalar_lea.vmem %s0, 110
    %v108 = vld [vmem:[%s107] sm:$0x2]
    %vm109 = vcmask 1041409
    %v110 = vsel %vm109, %v108, %v106
    %111 = vrot.lane.b32.xlu0 %v110, 94
    %v112 = vpop.permute.xlu0 %111
    %vm113 = vcmask 786160
    %114 = vst.msk [vmem:[#allocation0] sm:$0x3] %vm113, %v112
    %s115 = scalar_lea.vmem %s0, 46
    %v116 = vld [vmem:[%s115] sm:$0x1]
    %s117 = scalar_lea.vmem %s0, 109
    %v118 = vld [vmem:[%s117] sm:$0x2]
    %vm119 = vcmask 1041409
    %v120 = vsel %vm119, %v118, %v116
    %121 = vrot.lane.b32.xlu0 %v120, 92
    %v122 = vpop.permute.xlu0 %121
    %vm123 = vcmask 769760
    %124 = vst.msk [vmem:[#allocation0] sm:$0x3] %vm123, %v122
    %s125 = scalar_lea.vmem %s0, 45
    %v126 = vld [vmem:[%s125] sm:$0x1]
    %s127 = scalar_lea.vmem %s0, 108
    %v128 = vld [vmem:[%s127] sm:$0x2]
    %vm129 = vcmask 1041409
    %v130 = vsel %vm129, %v128, %v126
    %131 = vrot.lane.b32.xlu0 %v130, 90
    %v132 = vpop.permute.xlu0 %131
    %vm133 = vcmask 753360
    %134 = vst.msk [vmem:[#allocation0] sm:$0x3] %vm133, %v132
    %s135 = scalar_lea.vmem %s0, 44
    %v136 = vld [vmem:[%s135] sm:$0x1]
    %s137 = scalar_lea.vmem %s0, 107
    %v138 = vld [vmem:[%s137] sm:$0x2]
    %vm139 = vcmask 1041409
    %v140 = vsel %vm139, %v138, %v136
    %141 = vrot.lane.b32.xlu0 %v140, 88
    %v142 = vpop.permute.xlu0 %141
    %vm143 = vcmask 736960
    %144 = vst.msk [vmem:[#allocation0] sm:$0x3] %vm143, %v142
    %s145 = scalar_lea.vmem %s0, 43
    %v146 = vld [vmem:[%s145] sm:$0x1]
    %s147 = scalar_lea.vmem %s0, 106
    %v148 = vld [vmem:[%s147] sm:$0x2]
    %vm149 = vcmask 1041409
    %v150 = vsel %vm149, %v148, %v146
    %151 = vrot.lane.b32.xlu0 %v150, 86
    %v152 = vpop.permute.xlu0 %151
    %vm153 = vcmask 720560
    %154 = vst.msk [vmem:[#allocation0] sm:$0x3] %vm153, %v152
    %s155 = scalar_lea.vmem %s0, 42
    %v156 = vld [vmem:[%s155] sm:$0x1]
    %s157 = scalar_lea.vmem %s0, 105
    %v158 = vld [vmem:[%s157] sm:$0x2]
    %vm159 = vcmask 1041409
    %v160 = vsel %vm159, %v158, %v156
    %161 = vrot.lane.b32.xlu0 %v160, 84
    %v162 = vpop.permute.xlu0 %161
    %vm163 = vcmask 704160
    %164 = vst.msk [vmem:[#allocation0] sm:$0x3] %vm163, %v162
    %s165 = scalar_lea.vmem %s0, 41
    %v166 = vld [vmem:[%s165] sm:$0x1]
    %s167 = scalar_lea.vmem %s0, 104
    %v168 = vld [vmem:[%s167] sm:$0x2]
    %vm169 = vcmask 1041409
    %v170 = vsel %vm169, %v168, %v166
    %171 = vrot.lane.b32.xlu0 %v170, 82
    %v172 = vpop.permute.xlu0 %171
    %vm173 = vcmask 687760
    %174 = vst.msk [vmem:[#allocation0] sm:$0x3] %vm173, %v172
    %s175 = scalar_lea.vmem %s0, 40
    %v176 = vld [vmem:[%s175] sm:$0x1]
    %s177 = scalar_lea.vmem %s0, 103
    %v178 = vld [vmem:[%s177] sm:$0x2]
    %vm179 = vcmask 1041409
    %v180 = vsel %vm179, %v178, %v176
    %181 = vrot.lane.b32.xlu0 %v180, 80
    %v182 = vpop.permute.xlu0 %181
    %vm183 = vcmask 671360
    %184 = vst.msk [vmem:[#allocation0] sm:$0x3] %vm183, %v182
    %s185 = scalar_lea.vmem %s0, 39
    %v186 = vld [vmem:[%s185] sm:$0x1]
    %s187 = scalar_lea.vmem %s0, 102
    %v188 = vld [vmem:[%s187] sm:$0x2]
    %vm189 = vcmask 1041409
    %v190 = vsel %vm189, %v188, %v186
    %191 = vrot.lane.b32.xlu0 %v190, 78
    %v192 = vpop.permute.xlu0 %191
    %vm193 = vcmask 654960
    %194 = vst.msk [vmem:[#allocation0] sm:$0x3] %vm193, %v192
    %s195 = scalar_lea.vmem %s0, 38
    %v196 = vld [vmem:[%s195] sm:$0x1]
    %s197 = scalar_lea.vmem %s0, 101
    %v198 = vld [vmem:[%s197] sm:$0x2]
    %vm199 = vcmask 1041409
    %v200 = vsel %vm199, %v198, %v196
    %201 = vrot.lane.b32.xlu0 %v200, 76
    %v202 = vpop.permute.xlu0 %201
    %vm203 = vcmask 638560
    %204 = vst.msk [vmem:[#allocation0] sm:$0x3] %vm203, %v202
    %s205 = scalar_lea.vmem %s0, 37
    %v206 = vld [vmem:[%s205] sm:$0x1]
    %s207 = scalar_lea.vmem %s0, 100
    %v208 = vld [vmem:[%s207] sm:$0x2]
    %vm209 = vcmask 1041409
    %v210 = vsel %vm209, %v208, %v206
    %211 = vrot.lane.b32.xlu0 %v210, 74
    %v212 = vpop.permute.xlu0 %211
    %vm213 = vcmask 622160
    %214 = vst.msk [vmem:[#allocation0] sm:$0x3] %vm213, %v212
    %s215 = scalar_lea.vmem %s0, 36
    %v216 = vld [vmem:[%s215] sm:$0x1]
    %s217 = scalar_lea.vmem %s0, 99
    %v218 = vld [vmem:[%s217] sm:$0x2]
    %vm219 = vcmask 1041409
    %v220 = vsel %vm219, %v218, %v216
    %221 = vrot.lane.b32.xlu0 %v220, 72
    %v222 = vpop.permute.xlu0 %221
    %vm223 = vcmask 605760
    %224 = vst.msk [vmem:[#allocation0] sm:$0x3] %vm223, %v222
    %s225 = scalar_lea.vmem %s0, 35
    %v226 = vld [vmem:[%s225] sm:$0x1]
    %s227 = scalar_lea.vmem %s0, 98
    %v228 = vld [vmem:[%s227] sm:$0x2]
    %vm229 = vcmask 1041409
    %v230 = vsel %vm229, %v228, %v226
    %231 = vrot.lane.b32.xlu0 %v230, 70
    %v232 = vpop.permute.xlu0 %231
    %vm233 = vcmask 589360
    %234 = vst.msk [vmem:[#allocation0] sm:$0x3] %vm233, %v232
    %s235 = scalar_lea.vmem %s0, 34
    %v236 = vld [vmem:[%s235] sm:$0x1]
    %s237 = scalar_lea.vmem %s0, 97
    %v238 = vld [vmem:[%s237] sm:$0x2]
    %vm239 = vcmask 1041409
    %v240 = vsel %vm239, %v238, %v236
    %241 = vrot.lane.b32.xlu0 %v240, 68
    %v242 = vpop.permute.xlu0 %241
    %vm243 = vcmask 572960
    %244 = vst.msk [vmem:[#allocation0] sm:$0x3] %vm243, %v242
    %s245 = scalar_lea.vmem %s0, 33
    %v246 = vld [vmem:[%s245] sm:$0x1]
    %s247 = scalar_lea.vmem %s0, 96
    %v248 = vld [vmem:[%s247] sm:$0x2]
    %vm249 = vcmask 1041409
    %v250 = vsel %vm249, %v248, %v246
    %251 = vrot.lane.b32.xlu0 %v250, 66
    %v252 = vpop.permute.xlu0 %251
    %vm253 = vcmask 556560
    %254 = vst.msk [vmem:[#allocation0] sm:$0x3] %vm253, %v252
    %s255 = scalar_lea.vmem %s0, 32
    %v256 = vld [vmem:[%s255] sm:$0x1]
    %s257 = scalar_lea.vmem %s0, 95
    %v258 = vld [vmem:[%s257] sm:$0x2]
    %vm259 = vcmask 1041409
    %v260 = vsel %vm259, %v258, %v256
    %261 = vrot.lane.b32.xlu0 %v260, 64
    %v262 = vpop.permute.xlu0 %261
    %vm263 = vcmask 540160
    %264 = vst.msk [vmem:[#allocation0] sm:$0x3] %vm263, %v262
    %s265 = scalar_lea.vmem %s0, 31
    %v266 = vld [vmem:[%s265] sm:$0x1]
    %s267 = scalar_lea.vmem %s0, 94
    %v268 = vld [vmem:[%s267] sm:$0x2]
    %vm269 = vcmask 1041409
    %v270 = vsel %vm269, %v268, %v266
    %271 = vrot.lane.b32.xlu0 %v270, 62
    %v272 = vpop.permute.xlu0 %271
    %vm273 = vcmask 523760
    %274 = vst.msk [vmem:[#allocation0] sm:$0x3] %vm273, %v272
    %s275 = scalar_lea.vmem %s0, 30
    %v276 = vld [vmem:[%s275] sm:$0x1]
    %s277 = scalar_lea.vmem %s0, 93
    %v278 = vld [vmem:[%s277] sm:$0x2]
    %vm279 = vcmask 1041409
    %v280 = vsel %vm279, %v278, %v276
    %281 = vrot.lane.b32.xlu0 %v280, 60
    %v282 = vpop.permute.xlu0 %281
    %vm283 = vcmask 507360
    %284 = vst.msk [vmem:[#allocation0] sm:$0x3] %vm283, %v282
    %s285 = scalar_lea.vmem %s0, 29
    %v286 = vld [vmem:[%s285] sm:$0x1]
    %s287 = scalar_lea.vmem %s0, 92
    %v288 = vld [vmem:[%s287] sm:$0x2]
    %vm289 = vcmask 1041409
    %v290 = vsel %vm289, %v288, %v286
    %291 = vrot.lane.b32.xlu0 %v290, 58
    %v292 = vpop.permute.xlu0 %291
    %vm293 = vcmask 490960
    %294 = vst.msk [vmem:[#allocation0] sm:$0x3] %vm293, %v292
    %s295 = scalar_lea.vmem %s0, 28
    %v296 = vld [vmem:[%s295] sm:$0x1]
    %s297 = scalar_lea.vmem %s0, 91
    %v298 = vld [vmem:[%s297] sm:$0x2]
    %vm299 = vcmask 1041409
    %v300 = vsel %vm299, %v298, %v296
    %301 = vrot.lane.b32.xlu0 %v300, 56
    %v302 = vpop.permute.xlu0 %301
    %vm303 = vcmask 474560
    %304 = vst.msk [vmem:[#allocation0] sm:$0x3] %vm303, %v302
    %s305 = scalar_lea.vmem %s0, 27
    %v306 = vld [vmem:[%s305] sm:$0x1]
    %s307 = scalar_lea.vmem %s0, 90
    %v308 = vld [vmem:[%s307] sm:$0x2]
    %vm309 = vcmask 1041409
    %v310 = vsel %vm309, %v308, %v306
    %311 = vrot.lane.b32.xlu0 %v310, 54
    %v312 = vpop.permute.xlu0 %311
    %vm313 = vcmask 458160
    %314 = vst.msk [vmem:[#allocation0] sm:$0x3] %vm313, %v312
    %s315 = scalar_lea.vmem %s0, 26
    %v316 = vld [vmem:[%s315] sm:$0x1]
    %s317 = scalar_lea.vmem %s0, 89
    %v318 = vld [vmem:[%s317] sm:$0x2]
    %vm319 = vcmask 1041409
    %v320 = vsel %vm319, %v318, %v316
    %321 = vrot.lane.b32.xlu0 %v320, 52
    %v322 = vpop.permute.xlu0 %321
    %vm323 = vcmask 441760
    %324 = vst.msk [vmem:[#allocation0] sm:$0x3] %vm323, %v322
    %s325 = scalar_lea.vmem %s0, 25
    %v326 = vld [vmem:[%s325] sm:$0x1]
    %s327 = scalar_lea.vmem %s0, 88
    %v328 = vld [vmem:[%s327] sm:$0x2]
    %vm329 = vcmask 1041409
    %v330 = vsel %vm329, %v328, %v326
    %331 = vrot.lane.b32.xlu0 %v330, 50
    %v332 = vpop.permute.xlu0 %331
    %vm333 = vcmask 425360
    %334 = vst.msk [vmem:[#allocation0] sm:$0x3] %vm333, %v332
    %s335 = scalar_lea.vmem %s0, 24
    %v336 = vld [vmem:[%s335] sm:$0x1]
    %s337 = scalar_lea.vmem %s0, 87
    %v338 = vld [vmem:[%s337] sm:$0x2]
    %vm339 = vcmask 1041409
    %v340 = vsel %vm339, %v338, %v336
    %341 = vrot.lane.b32.xlu0 %v340, 48
    %v342 = vpop.permute.xlu0 %341
    %vm343 = vcmask 408960
    %344 = vst.msk [vmem:[#allocation0] sm:$0x3] %vm343, %v342
    %s345 = scalar_lea.vmem %s0, 23
    %v346 = vld [vmem:[%s345] sm:$0x1]
    %s347 = scalar_lea.vmem %s0, 86
    %v348 = vld [vmem:[%s347] sm:$0x2]
    %vm349 = vcmask 1041409
    %v350 = vsel %vm349, %v348, %v346
    %351 = vrot.lane.b32.xlu0 %v350, 46
    %v352 = vpop.permute.xlu0 %351
    %vm353 = vcmask 392560
    %354 = vst.msk [vmem:[#allocation0] sm:$0x3] %vm353, %v352
    %s355 = scalar_lea.vmem %s0, 22
    %v356 = vld [vmem:[%s355] sm:$0x1]
    %s357 = scalar_lea.vmem %s0, 85
    %v358 = vld [vmem:[%s357] sm:$0x2]
    %vm359 = vcmask 1041409
    %v360 = vsel %vm359, %v358, %v356
    %361 = vrot.lane.b32.xlu0 %v360, 44
    %v362 = vpop.permute.xlu0 %361
    %vm363 = vcmask 376160
    %364 = vst.msk [vmem:[#allocation0] sm:$0x3] %vm363, %v362
    %s365 = scalar_lea.vmem %s0, 21
    %v366 = vld [vmem:[%s365] sm:$0x1]
    %s367 = scalar_lea.vmem %s0, 84
    %v368 = vld [vmem:[%s367] sm:$0x2]
    %vm369 = vcmask 1041409
    %v370 = vsel %vm369, %v368, %v366
    %371 = vrot.lane.b32.xlu0 %v370, 42
    %v372 = vpop.permute.xlu0 %371
    %vm373 = vcmask 359760
    %374 = vst.msk [vmem:[#allocation0] sm:$0x3] %vm373, %v372
    %s375 = scalar_lea.vmem %s0, 20
    %v376 = vld [vmem:[%s375] sm:$0x1]
    %s377 = scalar_lea.vmem %s0, 83
    %v378 = vld [vmem:[%s377] sm:$0x2]
    %vm379 = vcmask 1041409
    %v380 = vsel %vm379, %v378, %v376
    %381 = vrot.lane.b32.xlu0 %v380, 40
    %v382 = vpop.permute.xlu0 %381
    %vm383 = vcmask 343360
    %384 = vst.msk [vmem:[#allocation0] sm:$0x3] %vm383, %v382
    %s385 = scalar_lea.vmem %s0, 19
    %v386 = vld [vmem:[%s385] sm:$0x1]
    %s387 = scalar_lea.vmem %s0, 82
    %v388 = vld [vmem:[%s387] sm:$0x2]
    %vm389 = vcmask 1041409
    %v390 = vsel %vm389, %v388, %v386
    %391 = vrot.lane.b32.xlu0 %v390, 38
    %v392 = vpop.permute.xlu0 %391
    %vm393 = vcmask 326960
    %394 = vst.msk [vmem:[#allocation0] sm:$0x3] %vm393, %v392
    %s395 = scalar_lea.vmem %s0, 18
    %v396 = vld [vmem:[%s395] sm:$0x1]
    %s397 = scalar_lea.vmem %s0, 81
    %v398 = vld [vmem:[%s397] sm:$0x2]
    %vm399 = vcmask 1041409
    %v400 = vsel %vm399, %v398, %v396
    %401 = vrot.lane.b32.xlu0 %v400, 36
    %v402 = vpop.permute.xlu0 %401
    %vm403 = vcmask 310560
    %404 = vst.msk [vmem:[#allocation0] sm:$0x3] %vm403, %v402
    %s405 = scalar_lea.vmem %s0, 17
    %v406 = vld [vmem:[%s405] sm:$0x1]
    %s407 = scalar_lea.vmem %s0, 80
    %v408 = vld [vmem:[%s407] sm:$0x2]
    %vm409 = vcmask 1041409
    %v410 = vsel %vm409, %v408, %v406
    %411 = vrot.lane.b32.xlu0 %v410, 34
    %v412 = vpop.permute.xlu0 %411
    %vm413 = vcmask 294160
    %414 = vst.msk [vmem:[#allocation0] sm:$0x3] %vm413, %v412
    %s415 = scalar_lea.vmem %s0, 16
    %v416 = vld [vmem:[%s415] sm:$0x1]
    %s417 = scalar_lea.vmem %s0, 79
    %v418 = vld [vmem:[%s417] sm:$0x2]
    %vm419 = vcmask 1041409
    %v420 = vsel %vm419, %v418, %v416
    %421 = vrot.lane.b32.xlu0 %v420, 32
    %v422 = vpop.permute.xlu0 %421
    %vm423 = vcmask 277760
    %424 = vst.msk [vmem:[#allocation0] sm:$0x3] %vm423, %v422
    %s425 = scalar_lea.vmem %s0, 15
    %v426 = vld [vmem:[%s425] sm:$0x1]
    %s427 = scalar_lea.vmem %s0, 78
    %v428 = vld [vmem:[%s427] sm:$0x2]
    %vm429 = vcmask 1041409
    %v430 = vsel %vm429, %v428, %v426
    %431 = vrot.lane.b32.xlu0 %v430, 30
    %v432 = vpop.permute.xlu0 %431
    %vm433 = vcmask 261360
    %434 = vst.msk [vmem:[#allocation0] sm:$0x3] %vm433, %v432
    %s435 = scalar_lea.vmem %s0, 14
    %v436 = vld [vmem:[%s435] sm:$0x1]
    %s437 = scalar_lea.vmem %s0, 77
    %v438 = vld [vmem:[%s437] sm:$0x2]
    %vm439 = vcmask 1041409
    %v440 = vsel %vm439, %v438, %v436
    %441 = vrot.lane.b32.xlu0 %v440, 28
    %v442 = vpop.permute.xlu0 %441
    %vm443 = vcmask 244960
    %444 = vst.msk [vmem:[#allocation0] sm:$0x3] %vm443, %v442
    %s445 = scalar_lea.vmem %s0, 13
    %v446 = vld [vmem:[%s445] sm:$0x1]
    %s447 = scalar_lea.vmem %s0, 76
    %v448 = vld [vmem:[%s447] sm:$0x2]
    %vm449 = vcmask 1041409
    %v450 = vsel %vm449, %v448, %v446
    %451 = vrot.lane.b32.xlu0 %v450, 26
    %v452 = vpop.permute.xlu0 %451
    %vm453 = vcmask 228560
    %454 = vst.msk [vmem:[#allocation0] sm:$0x3] %vm453, %v452
    %s455 = scalar_lea.vmem %s0, 12
    %v456 = vld [vmem:[%s455] sm:$0x1]
    %s457 = scalar_lea.vmem %s0, 75
    %v458 = vld [vmem:[%s457] sm:$0x2]
    %vm459 = vcmask 1041409
    %v460 = vsel %vm459, %v458, %v456
    %461 = vrot.lane.b32.xlu0 %v460, 24
    %v462 = vpop.permute.xlu0 %461
    %vm463 = vcmask 212160
    %464 = vst.msk [vmem:[#allocation0] sm:$0x3] %vm463, %v462
    %s465 = scalar_lea.vmem %s0, 11
    %v466 = vld [vmem:[%s465] sm:$0x1]
    %s467 = scalar_lea.vmem %s0, 74
    %v468 = vld [vmem:[%s467] sm:$0x2]
    %vm469 = vcmask 1041409
    %v470 = vsel %vm469, %v468, %v466
    %471 = vrot.lane.b32.xlu0 %v470, 22
    %v472 = vpop.permute.xlu0 %471
    %vm473 = vcmask 195760
    %474 = vst.msk [vmem:[#allocation0] sm:$0x3] %vm473, %v472
    %s475 = scalar_lea.vmem %s0, 10
    %v476 = vld [vmem:[%s475] sm:$0x1]
    %s477 = scalar_lea.vmem %s0, 73
    %v478 = vld [vmem:[%s477] sm:$0x2]
    %vm479 = vcmask 1041409
    %v480 = vsel %vm479, %v478, %v476
    %481 = vrot.lane.b32.xlu0 %v480, 20
    %v482 = vpop.permute.xlu0 %481
    %vm483 = vcmask 179360
    %484 = vst.msk [vmem:[#allocation0] sm:$0x3] %vm483, %v482
    %s485 = scalar_lea.vmem %s0, 9
    %v486 = vld [vmem:[%s485] sm:$0x1]
    %s487 = scalar_lea.vmem %s0, 72
    %v488 = vld [vmem:[%s487] sm:$0x2]
    %vm489 = vcmask 1041409
    %v490 = vsel %vm489, %v488, %v486
    %491 = vrot.lane.b32.xlu0 %v490, 18
    %v492 = vpop.permute.xlu0 %491
    %vm493 = vcmask 162960
    %494 = vst.msk [vmem:[#allocation0] sm:$0x3] %vm493, %v492
    %s495 = scalar_lea.vmem %s0, 8
    %v496 = vld [vmem:[%s495] sm:$0x1]
    %s497 = scalar_lea.vmem %s0, 71
    %v498 = vld [vmem:[%s497] sm:$0x2]
    %vm499 = vcmask 1041409
    %v500 = vsel %vm499, %v498, %v496
    %501 = vrot.lane.b32.xlu0 %v500, 16
    %v502 = vpop.permute.xlu0 %501
    %vm503 = vcmask 146560
    %504 = vst.msk [vmem:[#allocation0] sm:$0x3] %vm503, %v502
    %s505 = scalar_lea.vmem %s0, 7
    %v506 = vld [vmem:[%s505] sm:$0x1]
    %s507 = scalar_lea.vmem %s0, 70
    %v508 = vld [vmem:[%s507] sm:$0x2]
    %vm509 = vcmask 1041409
    %v510 = vsel %vm509, %v508, %v506
    %511 = vrot.lane.b32.xlu0 %v510, 14
    %v512 = vpop.permute.xlu0 %511
    %vm513 = vcmask 130160
    %514 = vst.msk [vmem:[#allocation0] sm:$0x3] %vm513, %v512
    %s515 = scalar_lea.vmem %s0, 6
    %v516 = vld [vmem:[%s515] sm:$0x1]
    %s517 = scalar_lea.vmem %s0, 69
    %v518 = vld [vmem:[%s517] sm:$0x2]
    %vm519 = vcmask 1041409
    %v520 = vsel %vm519, %v518, %v516
    %521 = vrot.lane.b32.xlu0 %v520, 12
    %v522 = vpop.permute.xlu0 %521
    %vm523 = vcmask 113760
    %524 = vst.msk [vmem:[#allocation0] sm:$0x3] %vm523, %v522
    %s525 = scalar_lea.vmem %s0, 5
    %v526 = vld [vmem:[%s525] sm:$0x1]
    %s527 = scalar_lea.vmem %s0, 68
    %v528 = vld [vmem:[%s527] sm:$0x2]
    %vm529 = vcmask 1041409
    %v530 = vsel %vm529, %v528, %v526
    %531 = vrot.lane.b32.xlu0 %v530, 10
    %v532 = vpop.permute.xlu0 %531
    %vm533 = vcmask 97360
    %534 = vst.msk [vmem:[#allocation0] sm:$0x3] %vm533, %v532
    %s535 = scalar_lea.vmem %s0, 4
    %v536 = vld [vmem:[%s535] sm:$0x1]
    %s537 = scalar_lea.vmem %s0, 67
    %v538 = vld [vmem:[%s537] sm:$0x2]
    %vm539 = vcmask 1041409
    %v540 = vsel %vm539, %v538, %v536
    %541 = vrot.lane.b32.xlu0 %v540, 8
    %v542 = vpop.permute.xlu0 %541
    %vm543 = vcmask 80960
    %544 = vst.msk [vmem:[#allocation0] sm:$0x3] %vm543, %v542
    %s545 = scalar_lea.vmem %s0, 3
    %v546 = vld [vmem:[%s545] sm:$0x1]
    %s547 = scalar_lea.vmem %s0, 66
    %v548 = vld [vmem:[%s547] sm:$0x2]
    %vm549 = vcmask 1041409
    %v550 = vsel %vm549, %v548, %v546
    %551 = vrot.lane.b32.xlu0 %v550, 6
    %v552 = vpop.permute.xlu0 %551
    %vm553 = vcmask 64560
    %554 = vst.msk [vmem:[#allocation0] sm:$0x3] %vm553, %v552
    %s555 = scalar_lea.vmem %s0, 2
    %v556 = vld [vmem:[%s555] sm:$0x1]
    %s557 = scalar_lea.vmem %s0, 65
    %v558 = vld [vmem:[%s557] sm:$0x2]
    %vm559 = vcmask 1041409
    %v560 = vsel %vm559, %v558, %v556
    %561 = vrot.lane.b32.xlu0 %v560, 4
    %v562 = vpop.permute.xlu0 %561
    %vm563 = vcmask 48160
    %564 = vst.msk [vmem:[#allocation0] sm:$0x3] %vm563, %v562
    %s565 = scalar_lea.vmem %s0, 1
    %v566 = vld [vmem:[%s565] sm:$0x1]
    %s567 = scalar_lea.vmem %s0, 64
    %v568 = vld [vmem:[%s567] sm:$0x2]
    %vm569 = vcmask 1041409
    %v570 = vsel %vm569, %v568, %v566
    %571 = vrot.lane.b32.xlu0 %v570, 2
    %v572 = vpop.permute.xlu0 %571
    %vm573 = vcmask 31760
    %574 = vst.msk [vmem:[#allocation0] sm:$0x3] %vm573, %v572
    %s576 = sshll.u32 1, 2
    %s577 = ssub.s32 %s576, 1
    %v579 = vld [vmem:[#allocation0] sm:%s577]
    %s580 = sshll.u32 1, 2
    %s581 = ssub.s32 %s580, 1
    %582 = vst [vmem:[%s1] sm:%s581] %v579

// kernel: rotary_channel_embedding_fixed.1
$region0: #{rotary_channel_embedding_fixed.1}
  #allocation0 [shape = 'u32[]', space=smem, size = 0x4, offset = 0x4, fixed_abs, tag = 'smem constant byte address 0x4 - core index']
  #allocation1 [shape = 'u32[144,128]{1,0:T(1,128)}', space=vmem, size = 0x12000, scoped, tag = 'internal scratch']
  %s0 = inlined_call_operand.vmem [shape: f32[2,14,128], index: 0, kind: input, shape index: {}]
  %s1 = inlined_call_operand.vmem [shape: f32[14,128], index: 1, kind: input, shape index: {}]
  %s2 = inlined_call_operand.vmem [shape: f32[14,128], index: 2, kind: input, shape index: {}]
  %s3 = inlined_call_operand.vmem [shape: f32[14,128], index: 3, kind: input, shape index: {}]
  %s4 = inlined_call_operand.vmem [shape: f32[2,14,128], index: 4, kind: output, shape index: {}]
  %s5 = sld [smem:[#allocation0]]
  $region49: #{rotary_channel_embedding_fixed.1} parent=0
    _
  %s7 = ssub.s32 1, %s5
  %s8 = scalar_select 0, %s7, %s5
  loop: start=0, step=1, limit=4
  $region2: #{rotary_channel_embedding_fixed.1} parent=0 // loop_pre_header
    _
  $region3: #{rotary_channel_embedding_fixed.1} parent=0 // loop_header
    %s10 = sphi 0, %s14
    %p11 = scmp.ge.s32.totalorder %s10, 4
    %s17 = sphi 0, %s29
    %s18 = sphi 0, %s25
    %s19 = sphi 0, %s17
    %s20 = sphi 0, %s18
    %s21 = sphi 0, %s19
    %s22 = sphi 0, %s20
    %s34 = sphi 0, %s36
    %s37 = sphi 0, %s34
    %s38 = sphi 0, %s37
    %s54 = sphi 0, %s38
    %s58 = sphi 0, %s58
    %s60 = sphi 0, %s58
    %s61 = sphi 0, %s60
    %s75 = sphi 0, %s61
    %s79 = sphi 0, %s79
    %s81 = sphi 0, %s79
    %s82 = sphi 0, %s81
    %s96 = sphi 0, %s82
    %s100 = sphi 0, %s100
    %s102 = sphi 0, %s100
    %s103 = sphi 0, %s102
    %s117 = sphi 0, %s103
    %s125 = sphi 0, %s127
    %s128 = sphi 0, %s125
    %s129 = sphi 0, %s128
    %s145 = sphi 0, %s129
  $region4: #{rotary_channel_embedding_fixed.1} parent=0 // loop_header_branch
    %13 = sbr.rel (%p11) target = $region8
  $region5: #{rotary_channel_embedding_fixed.1} parent=0 // loop_body
    %s15 = ssub.s32 %s10, 1
    %s16 = ssub.s32 %s10, 2
    %s23 = sadd.s32 1, %s18
    %p24 = scmp.ge.s32.totalorder %s23, 2
    %s25 = scalar_select %p24, 0, %s23
    %s26 = sadd.s32 1, %s17
    %s27 = scalar_select %p24, %s26, %s17
    %p28 = scmp.ge.s32.totalorder %s27, 1
    %s29 = scalar_select %p28, 0, %s27
    %s30 = ssub.s32 %s18, %s25
    %s31 = ssub.s32 %s17, %s29
    %s32 = sor.u32 %s30, %s31
    %p33 = scmp.eq.s32.totalorder %s32, 0
    %s35 = sadd.s32 %s34, 1
    %s36 = scalar_select %p33, %s34, %s35
    %p39 = pneg %p33
    %p40 = scmp.eq.s32.totalorder %s10, 1
    %p41 = por %p39, %p40
    %p42 = scmp.ne.s32.totalorder %s34, %s37
    %p43 = scmp.eq.s32.totalorder %s10, 0
    %p44 = por %p42, %p43
    %p45 = scmp.ne.s32.totalorder %s34, %s37
    %p46 = scmp.eq.s32.totalorder %s15, 1
    %p47 = por %p45, %p46
    %p48 = scmp.ne.s32.totalorder %s37, %s38
    %p49 = scmp.eq.s32.totalorder %s15, 0
    %p50 = por %p48, %p49
    %p51 = scmp.ne.s32.totalorder %s37, %s38
    %p52 = scmp.eq.s32.totalorder %s16, 1
    %p53 = por %p51, %p52
    %p55 = scmp.ne.s32.totalorder %s38, %s54
    %p56 = scmp.eq.s32.totalorder %s16, 0
    %p57 = por %p55, %p56
    %s59 = sadd.s32 %s58, 1
    %p62 = scmp.eq.s32.totalorder %s10, 1
    %p63 = scmp.ne.s32.totalorder %s58, %s60
    %p64 = scmp.eq.s32.totalorder %s10, 0
    %p65 = por %p63, %p64
    %p66 = scmp.ne.s32.totalorder %s58, %s60
    %p67 = scmp.eq.s32.totalorder %s15, 1
    %p68 = por %p66, %p67
    %p69 = scmp.ne.s32.totalorder %s60, %s61
    %p70 = scmp.eq.s32.totalorder %s15, 0
    %p71 = por %p69, %p70
    %p72 = scmp.ne.s32.totalorder %s60, %s61
    %p73 = scmp.eq.s32.totalorder %s16, 1
    %p74 = por %p72, %p73
    %p76 = scmp.ne.s32.totalorder %s61, %s75
    %p77 = scmp.eq.s32.totalorder %s16, 0
    %p78 = por %p76, %p77
    %s80 = sadd.s32 %s79, 1
    %p83 = scmp.eq.s32.totalorder %s10, 1
    %p84 = scmp.ne.s32.totalorder %s79, %s81
    %p85 = scmp.eq.s32.totalorder %s10, 0
    %p86 = por %p84, %p85
    %p87 = scmp.ne.s32.totalorder %s79, %s81
    %p88 = scmp.eq.s32.totalorder %s15, 1
    %p89 = por %p87, %p88
    %p90 = scmp.ne.s32.totalorder %s81, %s82
    %p91 = scmp.eq.s32.totalorder %s15, 0
    %p92 = por %p90, %p91
    %p93 = scmp.ne.s32.totalorder %s81, %s82
    %p94 = scmp.eq.s32.totalorder %s16, 1
    %p95 = por %p93, %p94
    %p97 = scmp.ne.s32.totalorder %s82, %s96
    %p98 = scmp.eq.s32.totalorder %s16, 0
    %p99 = por %p97, %p98
    %s101 = sadd.s32 %s100, 1
    %p104 = scmp.eq.s32.totalorder %s10, 1
    %p105 = scmp.ne.s32.totalorder %s100, %s102
    %p106 = scmp.eq.s32.totalorder %s10, 0
    %p107 = por %p105, %p106
    %p108 = scmp.ne.s32.totalorder %s100, %s102
    %p109 = scmp.eq.s32.totalorder %s15, 1
    %p110 = por %p108, %p109
    %p111 = scmp.ne.s32.totalorder %s102, %s103
    %p112 = scmp.eq.s32.totalorder %s15, 0
    %p113 = por %p111, %p112
    %p114 = scmp.ne.s32.totalorder %s102, %s103
    %p115 = scmp.eq.s32.totalorder %s16, 1
    %p116 = por %p114, %p115
    %p118 = scmp.ne.s32.totalorder %s103, %s117
    %p119 = scmp.eq.s32.totalorder %s16, 0
    %p120 = por %p118, %p119
    %s121 = ssub.s32 %s18, %s25
    %s122 = ssub.s32 %s17, %s29
    %s123 = sor.u32 %s121, %s122
    %p124 = scmp.eq.s32.totalorder %s123, 0
    %s126 = sadd.s32 %s125, 1
    %s127 = scalar_select %p124, %s125, %s126
    %p130 = pneg %p124
    %p131 = scmp.eq.s32.totalorder %s10, 1
    %p132 = por %p130, %p131
    %p133 = scmp.ne.s32.totalorder %s125, %s128
    %p134 = scmp.eq.s32.totalorder %s10, 0
    %p135 = por %p133, %p134
    %p136 = scmp.ne.s32.totalorder %s125, %s128
    %p137 = scmp.eq.s32.totalorder %s15, 1
    %p138 = por %p136, %p137
    %p139 = scmp.ne.s32.totalorder %s128, %s129
    %p140 = scmp.eq.s32.totalorder %s15, 0
    %p141 = por %p139, %p140
    %p142 = scmp.ne.s32.totalorder %s128, %s129
    %p143 = scmp.eq.s32.totalorder %s16, 1
    %p144 = por %p142, %p143
    %p146 = scmp.ne.s32.totalorder %s129, %s145
    %p147 = scmp.eq.s32.totalorder %s16, 0
    %p148 = por %p146, %p147
    %p149 = scmp.le.s32.totalorder 1, %s10
    %p150 = scmp.lt.s32.totalorder %s10, 3
    %p151 = pnand %p149, %p150
    %p152 = pneg %p151
    // Predicated region
    $region9: #{rotary_channel_embedding_fixed.1} parent=5 // pred_check
      _
    $region10: #{rotary_channel_embedding_fixed.1} parent=5 // pred_check_branch
      %154 = sbr.rel (%p151) target = $region12
    $region11: #{rotary_channel_embedding_fixed.1} parent=5 // pred_region
      %s155 = ssub.s32 %s10, 1
      // Predicated region
      $region13: #{rotary_channel_embedding_fixed.1} parent=11 // pred_check
        %p156 = pneg %p71
      $region14: #{rotary_channel_embedding_fixed.1} parent=11 // pred_check_branch
        %158 = sbr.rel (%p156) target = $region16
      $region15: #{rotary_channel_embedding_fixed.1} parent=11 // pred_region
        _
      $region16: #{rotary_channel_embedding_fixed.1} parent=11 // pred_fallthru
        _
      // Predicated region
      $region17: #{rotary_channel_embedding_fixed.1} parent=11 // pred_check
        %p159 = pneg %p92
      $region18: #{rotary_channel_embedding_fixed.1} parent=11 // pred_check_branch
        %161 = sbr.rel (%p159) target = $region20
      $region19: #{rotary_channel_embedding_fixed.1} parent=11 // pred_region
        _
      $region20: #{rotary_channel_embedding_fixed.1} parent=11 // pred_fallthru
        _
      // Predicated region
      $region21: #{rotary_channel_embedding_fixed.1} parent=11 // pred_check
        %p162 = pneg %p113
      $region22: #{rotary_channel_embedding_fixed.1} parent=11 // pred_check_branch
        %164 = sbr.rel (%p162) target = $region24
      $region23: #{rotary_channel_embedding_fixed.1} parent=11 // pred_region
        _
      $region24: #{rotary_channel_embedding_fixed.1} parent=11 // pred_fallthru
        _
    $region12: #{rotary_channel_embedding_fixed.1} parent=5 // pred_fallthru
      _
    %p165 = scmp.lt.s32.totalorder %s10, 2
    // Predicated region
    $region25: #{rotary_channel_embedding_fixed.1} parent=5 // pred_check
      %p166 = pneg %p165
    $region26: #{rotary_channel_embedding_fixed.1} parent=5 // pred_check_branch
      %168 = sbr.rel (%p166) target = $region28
    $region27: #{rotary_channel_embedding_fixed.1} parent=5 // pred_region
      // Predicated region
      $region29: #{rotary_channel_embedding_fixed.1} parent=27 // pred_check
        %p169 = pneg %p44
      $region30: #{rotary_channel_embedding_fixed.1} parent=27 // pred_check_branch
        %171 = sbr.rel (%p169) target = $region32
      $region31: #{rotary_channel_embedding_fixed.1} parent=27 // pred_region
        %s172 = smul.u32 2, %s17
        %p173 = scmp.lt.s32.totalorder %s18, 1
        %s174 = scalar_select %p173, %s18, 1
        %p175 = scmp.lt.s32.totalorder %s172, 1
        %s176 = scalar_select %p175, %s172, 1
        %s177 = smul.addr %s174, 2
        %s178 = sadd.s32 %s176, %s177
        %s179 = smul.addr %s178, 8
        %s180 = scalar_lea.vmem %s0, %s179
        %s181 = smul.u32 2, %s17
      $region32: #{rotary_channel_embedding_fixed.1} parent=27 // pred_fallthru
        _
    $region28: #{rotary_channel_embedding_fixed.1} parent=5 // pred_fallthru
      _
    %p182 = scmp.le.s32.totalorder 1, %s10
    %p183 = scmp.lt.s32.totalorder %s10, 3
    %p184 = pnand %p182, %p183
    %p185 = pneg %p184
    // Predicated region
    $region33: #{rotary_channel_embedding_fixed.1} parent=5 // pred_check
      _
    $region34: #{rotary_channel_embedding_fixed.1} parent=5 // pred_check_branch
      %187 = sbr.rel (%p184) target = $region36
    $region35: #{rotary_channel_embedding_fixed.1} parent=5 // pred_region
      %s188 = ssub.s32 %s10, 1
      %s189 = smul.u32 2, %s19
      %p190 = scmp.lt.s32.totalorder %s20, 1
      %s191 = scalar_select %p190, %s20, 1
      %p192 = scmp.lt.s32.totalorder %s189, 1
      %s193 = scalar_select %p192, %s189, 1
      %s194 = smul.addr %s191, 2
      %s195 = sadd.s32 %s193, %s194
      %s196 = smul.addr %s195, 8
      %s197 = scalar_lea.vmem %s0, %s196
      %p198 = pneg %p50
      %p199 = pneg %p47
      %p200 = pneg %p71
      %p201 = pneg %p68
      %p202 = pneg %p92
      %p203 = pneg %p89
      %p204 = pneg %p113
      %p205 = pneg %p110
      %p206 = pneg %p141
      %p207 = pneg %p138
      %s208 = smul.u32 2, %s19
      %p209 = scmp.lt.s32.totalorder %s20, 1
      %s210 = scalar_select %p209, %s20, 1
      %p211 = scmp.lt.s32.totalorder %s208, 1
      %s212 = scalar_select %p211, %s208, 1
      %s213 = smul.addr %s210, 2
      %s214 = sadd.s32 %s212, %s213
      %s215 = smul.addr %s214, 8
      %s216 = scalar_lea.vmem %s4, %s215
      %s217 = smul.u32 2, %s19
      %p218 = scmp.lt.s32.totalorder %s20, 1
      %s219 = scalar_select %p218, %s20, 1
      %p220 = scmp.lt.s32.totalorder %s217, 1
      %s221 = scalar_select %p220, %s217, 1
      %s222 = smul.addr %s219, 2
      %s223 = sadd.s32 %s221, %s222
      %s224 = smul.addr %s223, 8
      %s225 = scalar_lea.vmem %s0, %s224
      %s226 = smul.u32 2, %s19
      %s227 = smul.u32 2, %s19
      %p228 = scmp.lt.s32.totalorder %s20, 1
      %s229 = scalar_select %p228, %s20, 1
      %p230 = scmp.lt.s32.totalorder %s227, 1
      %s231 = scalar_select %p230, %s227, 1
      %s232 = smul.addr %s229, 2
      %s233 = sadd.s32 %s231, %s232
      %s234 = smul.addr %s233, 8
      %s235 = scalar_lea.vmem %s4, %s234
      %s236 = smul.u32 2, %s19
      %v237 = vld [vmem:[%s225] sm:$0xff]
      %v238 = vld [vmem:[%s225 + $0x8] sm:$0x3f]
      %239 = vrot.lane.b32.xlu0 %v237, 127
      %v240 = vpop.permute.xlu0 %239
      %241 = vrot.lane.b32.xlu0 %v238, 127
      %v242 = vpop.permute.xlu0 %241
      %243 = vrot.lane.b32.xlu0 %v237, 1
      %v244 = vpop.permute.xlu0 %243
      %245 = vrot.lane.b32.xlu0 %v238, 1
      %v246 = vpop.permute.xlu0 %245
      %v247 = vld [vmem:[%s1] sm:$0xff]
      %v248 = vld [vmem:[%s1 + $0x8] sm:$0x3f]
      %v249 = vmul.f32 %v237, %v247
      %v250 = vmul.f32 %v238, %v248
      %v251 = vld [vmem:[%s2] sm:$0xff]
      %v252 = vld [vmem:[%s2 + $0x8] sm:$0x3f]
      %v253 = vmul.f32 %v240, %v251
      %v254 = vmul.f32 %v242, %v252
      %v255 = vadd.f32 %v249, %v253
      %v256 = vadd.f32 %v250, %v254
      %v257 = vld [vmem:[%s3] sm:$0xff]
      %v258 = vld [vmem:[%s3 + $0x8] sm:$0x3f]
      %v259 = vmul.f32 %v244, %v257
      %v260 = vmul.f32 %v246, %v258
      %v261 = vadd.f32 %v255, %v259
      %v262 = vadd.f32 %v256, %v260
      %263 = vst [vmem:[%s235] sm:$0xff] %v261
      %264 = vst [vmem:[%s235 + $0x8] sm:$0x3f] %v262
      %s265 = smul.u32 2, %s19
      %p266 = scmp.lt.s32.totalorder %s20, 1
      %s267 = scalar_select %p266, %s20, 1
      %p268 = scmp.lt.s32.totalorder %s265, 1
      %s269 = scalar_select %p268, %s265, 1
      %s270 = smul.addr %s267, 2
      %s271 = sadd.s32 %s269, %s270
      %s272 = smul.addr %s271, 8
      %s273 = scalar_lea.vmem %s4, %s272
      // Predicated region
      $region37: #{rotary_channel_embedding_fixed.1} parent=35 // pred_check
        %p274 = pneg %p138
      $region38: #{rotary_channel_embedding_fixed.1} parent=35 // pred_check_branch
        %276 = sbr.rel (%p274) target = $region40
      $region39: #{rotary_channel_embedding_fixed.1} parent=35 // pred_region
        %s277 = smul.u32 2, %s19
      $region40: #{rotary_channel_embedding_fixed.1} parent=35 // pred_fallthru
        _
    $region36: #{rotary_channel_embedding_fixed.1} parent=5 // pred_fallthru
      _
    %p278 = scmp.le.s32.totalorder 2, %s10
    // Predicated region
    $region41: #{rotary_channel_embedding_fixed.1} parent=5 // pred_check
      %p279 = pneg %p278
    $region42: #{rotary_channel_embedding_fixed.1} parent=5 // pred_check_branch
      %281 = sbr.rel (%p279) target = $region44
    $region43: #{rotary_channel_embedding_fixed.1} parent=5 // pred_region
      %s282 = ssub.s32 %s10, 2
      // Predicated region
      $region45: #{rotary_channel_embedding_fixed.1} parent=43 // pred_check
        %p283 = pneg %p144
      $region46: #{rotary_channel_embedding_fixed.1} parent=43 // pred_check_branch
        %285 = sbr.rel (%p283) target = $region48
      $region47: #{rotary_channel_embedding_fixed.1} parent=43 // pred_region
        %s286 = smul.u32 2, %s21
        %p287 = scmp.lt.s32.totalorder %s22, 1
        %s288 = scalar_select %p287, %s22, 1
        %p289 = scmp.lt.s32.totalorder %s286, 1
        %s290 = scalar_select %p289, %s286, 1
        %s291 = smul.addr %s288, 2
        %s292 = sadd.s32 %s290, %s291
        %s293 = smul.addr %s292, 8
        %s294 = scalar_lea.vmem %s4, %s293
      $region48: #{rotary_channel_embedding_fixed.1} parent=43 // pred_fallthru
        _
    $region44: #{rotary_channel_embedding_fixed.1} parent=5 // pred_fallthru
      _
  $region6: #{rotary_channel_embedding_fixed.1} parent=0 // loop_footer
    %s14 = sadd.s32 1, %s10
  $region7: #{rotary_channel_embedding_fixed.1} parent=0 // loop_footer_branch
    %9 = sbr.rel target = $region3
  $region8: #{rotary_channel_embedding_fixed.1} parent=0 // loop_exit
    _

</llo_original>
